<compile_context>
chip_gen: v5e
topology: v5e:2x2
jax: 0.10.0
libtpu: 0.0.40
codegen_flags: <defaults>
</compile_context>

<pallas_src>
import jax
import jax.numpy as jnp
from jax.experimental import pallas as pl
from jax.experimental.pallas import tpu as pltpu


# ----------------------------------------------------------------------------
# Kernels
# ----------------------------------------------------------------------------
def _bn_stats_kernel(x_ref, s1_ref, s2_ref):
    """Single-pass per-batch partial sums for BN batch statistics.

    x_ref:  (Cin, T)   lane-dense activation tile (VMEM)
    s1_ref: (Cin, 1)   running sum(x)   accumulator for this batch entry
    s2_ref: (Cin, 1)   running sum(x^2) accumulator for this batch entry
    """
    @pl.when(pl.program_id(1) == 0)
    def _():
        s1_ref[...] = jnp.zeros_like(s1_ref)
        s2_ref[...] = jnp.zeros_like(s2_ref)

    x = x_ref[...].astype(jnp.float32)
    s1_ref[...] += jnp.sum(x, axis=1, keepdims=True)
    s2_ref[...] += jnp.sum(x * x, axis=1, keepdims=True)


def _outconv_small_kernel(x_ref, scale_ref, shift_ref, w_ref, b_ref, o_ref):
    """Tiny-channel path: 1x1 conv as sublane-dense outer-product FMAs (VPU).

    x_ref:     (Cin, T)    lane-dense activation tile (VMEM)
    scale_ref: (Cin, 1)    folded BN scale  gamma / sqrt(var + eps)
    shift_ref: (Cin, 1)    folded BN shift  beta - mean * scale
    w_ref:     (Cout, Cin) 1x1 conv weight (f32, VMEM)
    b_ref:     (Cout, 1)   conv bias (f32, VMEM)
    o_ref:     (Cout, T)
    """
    x = x_ref[...].astype(jnp.float32)
    h = jnp.maximum(x * scale_ref[...] + shift_ref[...], 0.0)      # BN + ReLU
    cin = h.shape[0]
    # Single (Cout, T) accumulator built from Cin outer-product FMAs -- no
    # per-row (1, T) temporaries and no concatenate relayout.
    acc = b_ref[...] + w_ref[:, 0:1] * h[0:1, :]
    for c in range(1, cin):                                        # static loop
        acc = acc + w_ref[:, c:c + 1] * h[c:c + 1, :]
    o_ref[...] = acc.astype(o_ref.dtype)


def _outconv_mxu_kernel(x_ref, scale_ref, shift_ref, w_ref, b_ref, o_ref):
    """Large-channel path: bf16 MXU matmul with f32 accumulation.

    w_ref is pre-cast to bf16 in the wrapper (resident weight, no per-step
    cast).  BN + ReLU are fused with the bf16 down-cast of the activations.
    """
    x = x_ref[...].astype(jnp.float32)
    h = jnp.maximum(x * scale_ref[...] + shift_ref[...], 0.0).astype(jnp.bfloat16)
    y = jnp.dot(w_ref[...], h, preferred_element_type=jnp.float32) + b_ref[...]
    o_ref[...] = y.astype(o_ref.dtype)


# ----------------------------------------------------------------------------
# Tiling / VMEM budgeting
# ----------------------------------------------------------------------------
def _vmem_budget_bytes():
    """Generation-aware (budget_for_tiles, scoped_vmem_limit) in bytes."""
    cap = None
    try:
        info = pltpu.get_tpu_info()
        cap = getattr(info, "vmem_capacity_bytes", None)
    except Exception:
        cap = None
    if not cap:
        cap = 64 * 1024 * 1024                       # conservative (v7x-sized)
    # leave headroom for compiler internals; v5e/v6e -> 96 MiB, v7x -> 48 MiB
    limit = min(cap - 16 * 1024 * 1024, 96 * 1024 * 1024)
    limit = max(limit, 16 * 1024 * 1024)
    budget = int(limit * 0.8)
    return budget, limit


def _pick_tile(hw_pad, cin, cout, n, budget_bytes):
    """Largest lane-dense spatial tile (multiple of 128, divides hw_pad) whose
    double-buffered I/O plus in-kernel temporaries fit the VMEM budget, while
    keeping at least ~4 grid steps for megacore parallelism."""
    cin_p = ((cin + 7) // 8) * 8                     # sublane-padded footprint
    cout_p = ((cout + 7) // 8) * 8
    # per spatial column (bytes):
    #   x tile (f32, 2x buffered) + out tile (f32, 2x buffered)
    #   + temporaries: f32 h, bf16 h, f32 y
    per_col = 4 * (2 * cin_p + 2 * cout_p) + 6 * cin_p + 4 * cout_p
    cap_cols = max(128, budget_bytes // per_col)
    cap_cols = min(cap_cols, 32768)

    if hw_pad <= cap_cols:
        t = hw_pad
    else:
        t = (cap_cols // 128) * 128
        while t > 128 and hw_pad % t != 0:
            t -= 128
        if hw_pad % t != 0:
            t = 128                                   # hw_pad is a 128 multiple

    # keep total parallel step count >= 4 so v7x's two TensorCores both work
    while (n * (hw_pad // t) < 4) and t > 128:
        nt = ((t // 2) // 128) * 128
        while nt > 128 and hw_pad % nt != 0:
            nt -= 128
        if nt < 128 or hw_pad % nt != 0:
            break
        t = nt
    return t


# ----------------------------------------------------------------------------
# Wrapper
# ----------------------------------------------------------------------------
def outconv_forward(x_nchw, params, *, eps=1e-5):
    """x_nchw: (N, Cin, H, W) -> (N, Cout, H, W); BN(train) -> ReLU -> 1x1 conv."""
    gamma = params["bn_weight"].astype(jnp.float32)
    beta = params["bn_bias"].astype(jnp.float32)
    w_conv = params["conv_weight"]
    b_conv = params["conv_bias"]

    N, Cin, H, W = x_nchw.shape
    Cout = w_conv.shape[0]
    HW = H * W
    HW_pad = ((HW + 127) // 128) * 128

    x3 = x_nchw.reshape(N, Cin, HW)                   # free channel-first reshape
    if HW_pad != HW:
        # pad spatial axis to a lane multiple: zeros add nothing to the BN sums
        # and the padded output columns are sliced off below.
        x3 = jnp.pad(x3, ((0, 0), (0, 0), (0, HW_pad - HW)))

    budget, vmem_limit = _vmem_budget_bytes()
    t_hw = _pick_tile(HW_pad, Cin, Cout, N, budget)
    assert HW_pad % t_hw == 0
    grid = (N, HW_pad // t_hw)

    # --- pass 1: single-read BN batch statistics (training-mode BN) ---------
    s1, s2 = pl.pallas_call(
        _bn_stats_kernel,
        out_shape=(jax.ShapeDtypeStruct((N, Cin, 1), jnp.float32),
                   jax.ShapeDtypeStruct((N, Cin, 1), jnp.float32)),
        grid_spec=pltpu.PrefetchScalarGridSpec(
            num_scalar_prefetch=0,
            grid=grid,
            in_specs=[pl.BlockSpec((None, Cin, t_hw), lambda n, s: (n, 0, s))],
            out_specs=[pl.BlockSpec((None, Cin, 1), lambda n, s: (n, 0, 0)),
                       pl.BlockSpec((None, Cin, 1), lambda n, s: (n, 0, 0))],
        ),
        compiler_params=pltpu.CompilerParams(
            dimension_semantics=("parallel", "arbitrary"),
            vmem_limit_bytes=vmem_limit,
        ),
    )(x3)

    cnt = float(N * HW)                               # true count, ignores padding
    mean = jnp.sum(s1[:, :, 0], axis=0) / cnt         # (Cin,)
    ex2 = jnp.sum(s2[:, :, 0], axis=0) / cnt
    var = jnp.maximum(ex2 - mean * mean, 0.0)         # biased variance
    scale = gamma / jnp.sqrt(var + eps)
    shift = beta - mean * scale

    scale2 = scale.reshape(Cin, 1)
    shift2 = shift.reshape(Cin, 1)
    b2 = b_conv.reshape(Cout, 1).astype(jnp.float32)

    small = (Cin <= 8) and (Cout <= 8)
    if small:
        kernel = _outconv_small_kernel
        w2 = w_conv.reshape(Cout, Cin).astype(jnp.float32)
        # NOTE: for Cin < 8 the (Cin, T) tile pads to 8 sublanes in VMEM; HBM
        # traffic is unaffected (mem-bound path), so batch-folding is skipped.
    else:
        kernel = _outconv_mxu_kernel
        w2 = w_conv.reshape(Cout, Cin).astype(jnp.bfloat16)   # pre-cast once

    # --- pass 2: fused BN + ReLU + 1x1 conv ----------------------------------
    out3 = pl.pallas_call(
        kernel,
        out_shape=jax.ShapeDtypeStruct((N, Cout, HW_pad), x_nchw.dtype),
        grid_spec=pltpu.PrefetchScalarGridSpec(
            num_scalar_prefetch=0,
            grid=grid,
            in_specs=[
                pl.BlockSpec((None, Cin, t_hw), lambda n, s: (n, 0, s)),
                pl.BlockSpec((Cin, 1), lambda n, s: (0, 0)),
                pl.BlockSpec((Cin, 1), lambda n, s: (0, 0)),
                pl.BlockSpec((Cout, Cin), lambda n, s: (0, 0)),
                pl.BlockSpec((Cout, 1), lambda n, s: (0, 0)),
            ],
            out_specs=pl.BlockSpec((None, Cout, t_hw), lambda n, s: (n, 0, s)),
        ),
        compiler_params=pltpu.CompilerParams(
            dimension_semantics=("parallel", "parallel"),
            vmem_limit_bytes=vmem_limit,
        ),
    )(x3, scale2, shift2, w2, b2)

    if HW_pad != HW:
        out3 = out3[:, :, :HW]
    return out3.reshape(N, Cout, H, W)                # free reshape back to NCHW


# ----------------------------------------------------------------------------
# Params / reference
# ----------------------------------------------------------------------------
def init_params(key, in_channels, out_channels):
    k_w, k_b = jax.random.split(key)
    fan_in = in_channels                              # kernel_size=1
    bound = 1.0 / jnp.sqrt(fan_in)
    return {
        # BatchNorm2d default init: weight=1, bias=0
        "bn_weight": jnp.ones((in_channels,), jnp.float32),
        "bn_bias": jnp.zeros((in_channels,), jnp.float32),
        # Conv2d(in, out, kernel_size=1): weight (Cout, Cin, 1, 1), bias (Cout,)
        "conv_weight": jax.random.uniform(
            k_w, (out_channels, in_channels, 1, 1), jnp.float32, -bound, bound
        ),
        "conv_bias": jax.random.uniform(
            k_b, (out_channels,), jnp.float32, -bound, bound
        ),
    }


def _reference(x, params, eps=1e-5):
    mean = jnp.mean(x, axis=(0, 2, 3), keepdims=True)
    var = jnp.mean(jnp.square(x - mean), axis=(0, 2, 3), keepdims=True)
    xn = (x - mean) / jnp.sqrt(var + eps)
    xn = xn * params["bn_weight"][None, :, None, None] \
        + params["bn_bias"][None, :, None, None]
    xr = jnp.maximum(xn, 0.0)
    cout, cin = params["conv_weight"].shape[:2]
    return (
        jnp.einsum("nchw,oc->nohw", xr, params["conv_weight"].reshape(cout, cin))
        + params["conv_bias"][None, :, None, None]
    )


if __name__ == "__main__":
    key = jax.random.PRNGKey(0)
    k_x, k_p = jax.random.split(key)

    # small-channel path (sublane-dense VPU FMA kernel)
    N, Cin, H, W = 2, 4, 16, 16
    Cout = 3
    x = jax.random.normal(k_x, (N, Cin, H, W), jnp.float32)
    params = init_params(k_p, Cin, Cout)

    out = outconv_forward(x, params)
    jax.block_until_ready(out)
    ref = _reference(x, params)
    assert out.shape == (N, Cout, H, W)
    assert jnp.allclose(out, ref, atol=1e-4, rtol=1e-4)

    # large-channel path (bf16 MXU kernel), looser tolerance due to bf16 operands
    k_x2, k_p2 = jax.random.split(jax.random.PRNGKey(1))
    Cin2, Cout2 = 64, 32
    x2 = jax.random.normal(k_x2, (N, Cin2, H, W), jnp.float32)
    params2 = init_params(k_p2, Cin2, Cout2)
    out2 = outconv_forward(x2, params2)
    jax.block_until_ready(out2)
    ref2 = _reference(x2, params2)
    assert out2.shape == (N, Cout2, H, W)
    assert jnp.allclose(out2, ref2, atol=5e-2, rtol=5e-2)

    # non-128-aligned spatial extent exercises the padding path
    k_x3 = jax.random.PRNGKey(2)
    x3 = jax.random.normal(k_x3, (N, Cin, 10, 10), jnp.float32)
    out3 = outconv_forward(x3, params)
    jax.block_until_ready(out3)
    ref3 = _reference(x3, params)
    assert out3.shape == (N, Cout, 10, 10)
    assert jnp.allclose(out3, ref3, atol=1e-4, rtol=1e-4)

    print("KERNEL_OK")
</pallas_src>

<mosaic_0001>
module attributes {stable_mosaic.version = 11 : i64} {
  func.func @_bn_stats_kernel(%arg0: i32, %arg1: i32, %arg2: memref<1x4x128xf32, #tpu.memory_space<vmem>>, %arg3: memref<1x4x1xf32, #tpu.memory_space<vmem>>, %arg4: memref<1x4x1xf32, #tpu.memory_space<vmem>>) attributes {dimension_semantics = [#tpu.dimension_semantics<parallel>, #tpu.dimension_semantics<arbitrary>], iteration_bounds = array<i64: 2, 2>, scalar_prefetch = 0 : i64, scratch_operands = 0 : i64, tpu.core_type = #tpu.core_type<tc>, window_params = [{transform_indices = @transform_0, window_bounds = array<i64: 1, 4, 128>}, {transform_indices = @transform_1, window_bounds = array<i64: 1, 4, 1>}, {transform_indices = @transform_2, window_bounds = array<i64: 1, 4, 1>}]} {
    %c0_i32 = arith.constant 0 : i32
    %0 = arith.cmpi eq, %arg1, %c0_i32 : i32
    %1 = arith.extui %0 : i1 to i32
    %c0_i32_0 = arith.constant 0 : i32
    %2 = arith.cmpi ne, %1, %c0_i32_0 : i32
    scf.if %2 {
      %cst_16 = arith.constant 0.000000e+00 : f32
      %22 = vector.broadcast %cst_16 : f32 to vector<4x1xf32>
      %c0_17 = arith.constant 0 : index
      %c0_18 = arith.constant 0 : index
      %c0_19 = arith.constant 0 : index
      %23 = vector.load %arg3[%c0_17, %c0_18, %c0_19] : memref<1x4x1xf32, #tpu.memory_space<vmem>>, vector<1x4x1xf32>
      %24 = vector.shape_cast %23 : vector<1x4x1xf32> to vector<4x1xf32>
      %25 = vector.shape_cast %22 : vector<4x1xf32> to vector<1x4x1xf32>
      tpu.vector_store %arg3[%c0_17, %c0_18, %c0_19], %25 {strides = array<i32>} : memref<1x4x1xf32, #tpu.memory_space<vmem>>, vector<1x4x1xf32>,
      %cst_20 = arith.constant 0.000000e+00 : f32
      %26 = vector.broadcast %cst_20 : f32 to vector<4x1xf32>
      %c0_21 = arith.constant 0 : index
      %c0_22 = arith.constant 0 : index
      %c0_23 = arith.constant 0 : index
      %27 = vector.load %arg4[%c0_21, %c0_22, %c0_23] : memref<1x4x1xf32, #tpu.memory_space<vmem>>, vector<1x4x1xf32>
      %28 = vector.shape_cast %27 : vector<1x4x1xf32> to vector<4x1xf32>
      %29 = vector.shape_cast %26 : vector<4x1xf32> to vector<1x4x1xf32>
      tpu.vector_store %arg4[%c0_21, %c0_22, %c0_23], %29 {strides = array<i32>} : memref<1x4x1xf32, #tpu.memory_space<vmem>>, vector<1x4x1xf32>,
    } else {
    }
    %c0 = arith.constant 0 : index
    %c0_1 = arith.constant 0 : index
    %c0_2 = arith.constant 0 : index
    %3 = vector.load %arg2[%c0, %c0_1, %c0_2] : memref<1x4x128xf32, #tpu.memory_space<vmem>>, vector<1x4x128xf32>
    %4 = vector.shape_cast %3 : vector<1x4x128xf32> to vector<4x128xf32>
    %c0_3 = arith.constant 0 : index
    %c0_4 = arith.constant 0 : index
    %c0_5 = arith.constant 0 : index
    %5 = vector.load %arg3[%c0_3, %c0_4, %c0_5] : memref<1x4x1xf32, #tpu.memory_space<vmem>>, vector<1x4x1xf32>
    %6 = vector.shape_cast %5 : vector<1x4x1xf32> to vector<4x1xf32>
    %cst = arith.constant dense<0.000000e+00> : vector<4xf32>
    %7 = vector.multi_reduction <add>, %4, %cst [1] : vector<4x128xf32> to vector<4xf32>
    %8 = vector.shape_cast %7 : vector<4xf32> to vector<4x1xf32>
    %9 = arith.addf %6, %8 : vector<4x1xf32>
    %c0_6 = arith.constant 0 : index
    %c0_7 = arith.constant 0 : index
    %c0_8 = arith.constant 0 : index
    %10 = vector.load %arg3[%c0_6, %c0_7, %c0_8] : memref<1x4x1xf32, #tpu.memory_space<vmem>>, vector<1x4x1xf32>
    %11 = vector.shape_cast %10 : vector<1x4x1xf32> to vector<4x1xf32>
    %12 = vector.shape_cast %9 : vector<4x1xf32> to vector<1x4x1xf32>
    tpu.vector_store %arg3[%c0_6, %c0_7, %c0_8], %12 {strides = array<i32>} : memref<1x4x1xf32, #tpu.memory_space<vmem>>, vector<1x4x1xf32>,
    %c0_9 = arith.constant 0 : index
    %c0_10 = arith.constant 0 : index
    %c0_11 = arith.constant 0 : index
    %13 = vector.load %arg4[%c0_9, %c0_10, %c0_11] : memref<1x4x1xf32, #tpu.memory_space<vmem>>, vector<1x4x1xf32>
    %14 = vector.shape_cast %13 : vector<1x4x1xf32> to vector<4x1xf32>
    %15 = arith.mulf %4, %4 : vector<4x128xf32>
    %cst_12 = arith.constant dense<0.000000e+00> : vector<4xf32>
    %16 = vector.multi_reduction <add>, %15, %cst_12 [1] : vector<4x128xf32> to vector<4xf32>
    %17 = vector.shape_cast %16 : vector<4xf32> to vector<4x1xf32>
    %18 = arith.addf %14, %17 : vector<4x1xf32>
    %c0_13 = arith.constant 0 : index
    %c0_14 = arith.constant 0 : index
    %c0_15 = arith.constant 0 : index
    %19 = vector.load %arg4[%c0_13, %c0_14, %c0_15] : memref<1x4x1xf32, #tpu.memory_space<vmem>>, vector<1x4x1xf32>
    %20 = vector.shape_cast %19 : vector<1x4x1xf32> to vector<4x1xf32>
    %21 = vector.shape_cast %18 : vector<4x1xf32> to vector<1x4x1xf32>
    tpu.vector_store %arg4[%c0_13, %c0_14, %c0_15], %21 {strides = array<i32>} : memref<1x4x1xf32, #tpu.memory_space<vmem>>, vector<1x4x1xf32>,
    return
  }
  func.func @transform_0(%arg0: i32, %arg1: i32) -> (i32, i32, i32) {
    %c0_i32 = arith.constant 0 : i32
    %c0_i32_0 = arith.constant 0 : i32
    return %arg0, %c0_i32, %arg1 : i32, i32, i32
  }
  func.func @transform_1(%arg0: i32, %arg1: i32) -> (i32, i32, i32) {
    %c0_i32 = arith.constant 0 : i32
    %c0_i32_0 = arith.constant 0 : i32
    %c0_i32_1 = arith.constant 0 : i32
    return %arg0, %c0_i32, %c0_i32_0 : i32, i32, i32
  }
  func.func @transform_2(%arg0: i32, %arg1: i32) -> (i32, i32, i32) {
    %c0_i32 = arith.constant 0 : i32
    %c0_i32_0 = arith.constant 0 : i32
    %c0_i32_1 = arith.constant 0 : i32
    return %arg0, %c0_i32, %c0_i32_0 : i32, i32, i32
  }
}

</mosaic_0001>

<llo_original>
// kernel: tpu_custom_call.1
$region0: #{tpu_custom_call.1}
  #allocation0 [shape = 'u32[]', space=smem, size = 0x4, offset = 0x4, fixed_abs, tag = 'smem constant byte address 0x4 - core index']
  #allocation1 [shape = 'u32[72,128]{1,0:T(1,128)}', space=vmem, size = 0x9000, scoped, tag = 'internal scratch']
  %s0 = inlined_call_operand.hbm [shape: f32[2,4,256], index: 0, kind: input, shape index: {}]
  %s1 = inlined_call_operand.vmem [shape: f32[2,4,1], index: 1, kind: output, shape index: {0}]
  %s2 = inlined_call_operand.vmem [shape: f32[2,4,1], index: 2, kind: output, shape index: {1}]
  %3 = xla_tuple %s1, %s2
  %s4 = sld [smem:[#allocation0]]
  $region53: #{tpu_custom_call.1} parent=0
    _
  %s6 = ssub.s32 1, %s4
  %s7 = scalar_select 0, %s6, %s4
  $region1: #{tpu_custom_call.1} parent=0
    #allocation2 [shape = 'u8[4096]{0}', space=vmem, size = 0x1000, scoped, tag = 'input window, operand 0']
    #allocation3 [shape = 's32[2]{0}', space=sflag, size = 0x8, scoped, tag = 'scoped memory for tpu_custom_call.1']
    %8 = vsyncpa [#allocation3], 0
    %s9 = scalar_lea.sflag [#allocation3], 1
    %10 = vsyncpa %s9, 0
    loop: start=0, step=1, limit=6
    $region2: #{tpu_custom_call.1} parent=1 // loop_pre_header
      _
    $region3: #{tpu_custom_call.1} parent=1 // loop_header
      %s12 = sphi 0, %s16
      %p13 = scmp.ge.s32.totalorder %s12, 6
      %s19 = sphi 0, %s31
      %s20 = sphi 0, %s27
      %s21 = sphi 0, %s19
      %s22 = sphi 0, %s20
      %s23 = sphi 0, %s21
      %s24 = sphi 0, %s22
      %s36 = sphi 0, %s38
      %s39 = sphi 0, %s36
      %s40 = sphi 0, %s39
      %s56 = sphi 0, %s40
      %s62 = sphi 0, %s64
      %s65 = sphi 0, %s62
      %s66 = sphi 0, %s65
      %s82 = sphi 0, %s66
      %s88 = sphi 0, %s90
      %s91 = sphi 0, %s88
      %s92 = sphi 0, %s91
      %s108 = sphi 0, %s92
    $region4: #{tpu_custom_call.1} parent=1 // loop_header_branch
      %15 = sbr.rel (%p13) target = $region8
    $region5: #{tpu_custom_call.1} parent=1 // loop_body
      %s17 = ssub.s32 %s12, 1
      %s18 = ssub.s32 %s12, 2
      %s25 = sadd.s32 1, %s20
      %p26 = scmp.ge.s32.totalorder %s25, 2
      %s27 = scalar_select %p26, 0, %s25
      %s28 = sadd.s32 1, %s19
      %s29 = scalar_select %p26, %s28, %s19
      %p30 = scmp.ge.s32.totalorder %s29, 2
      %s31 = scalar_select %p30, 0, %s29
      %s32 = ssub.s32 %s19, %s31
      %s33 = ssub.s32 %s20, %s27
      %s34 = sor.u32 %s32, %s33
      %p35 = scmp.eq.s32.totalorder %s34, 0
      %s37 = sadd.s32 %s36, 1
      %s38 = scalar_select %p35, %s36, %s37
      %p41 = pneg %p35
      %p42 = scmp.eq.s32.totalorder %s12, 3
      %p43 = por %p41, %p42
      %p44 = scmp.ne.s32.totalorder %s36, %s39
      %p45 = scmp.eq.s32.totalorder %s12, 0
      %p46 = por %p44, %p45
      %p47 = scmp.ne.s32.totalorder %s36, %s39
      %p48 = scmp.eq.s32.totalorder %s17, 3
      %p49 = por %p47, %p48
      %p50 = scmp.ne.s32.totalorder %s39, %s40
      %p51 = scmp.eq.s32.totalorder %s17, 0
      %p52 = por %p50, %p51
      %p53 = scmp.ne.s32.totalorder %s39, %s40
      %p54 = scmp.eq.s32.totalorder %s18, 3
      %p55 = por %p53, %p54
      %p57 = scmp.ne.s32.totalorder %s40, %s56
      %p58 = scmp.eq.s32.totalorder %s18, 0
      %p59 = por %p57, %p58
      %s60 = ssub.s32 %s19, %s31
      %p61 = scmp.eq.s32.totalorder %s60, 0
      %s63 = sadd.s32 %s62, 1
      %s64 = scalar_select %p61, %s62, %s63
      %p67 = pneg %p61
      %p68 = scmp.eq.s32.totalorder %s12, 3
      %p69 = por %p67, %p68
      %p70 = scmp.ne.s32.totalorder %s62, %s65
      %p71 = scmp.eq.s32.totalorder %s12, 0
      %p72 = por %p70, %p71
      %p73 = scmp.ne.s32.totalorder %s62, %s65
      %p74 = scmp.eq.s32.totalorder %s17, 3
      %p75 = por %p73, %p74
      %p76 = scmp.ne.s32.totalorder %s65, %s66
      %p77 = scmp.eq.s32.totalorder %s17, 0
      %p78 = por %p76, %p77
      %p79 = scmp.ne.s32.totalorder %s65, %s66
      %p80 = scmp.eq.s32.totalorder %s18, 3
      %p81 = por %p79, %p80
      %p83 = scmp.ne.s32.totalorder %s66, %s82
      %p84 = scmp.eq.s32.totalorder %s18, 0
      %p85 = por %p83, %p84
      %s86 = ssub.s32 %s19, %s31
      %p87 = scmp.eq.s32.totalorder %s86, 0
      %s89 = sadd.s32 %s88, 1
      %s90 = scalar_select %p87, %s88, %s89
      %p93 = pneg %p87
      %p94 = scmp.eq.s32.totalorder %s12, 3
      %p95 = por %p93, %p94
      %p96 = scmp.ne.s32.totalorder %s88, %s91
      %p97 = scmp.eq.s32.totalorder %s12, 0
      %p98 = por %p96, %p97
      %p99 = scmp.ne.s32.totalorder %s88, %s91
      %p100 = scmp.eq.s32.totalorder %s17, 3
      %p101 = por %p99, %p100
      %p102 = scmp.ne.s32.totalorder %s91, %s92
      %p103 = scmp.eq.s32.totalorder %s17, 0
      %p104 = por %p102, %p103
      %p105 = scmp.ne.s32.totalorder %s91, %s92
      %p106 = scmp.eq.s32.totalorder %s18, 3
      %p107 = por %p105, %p106
      %p109 = scmp.ne.s32.totalorder %s92, %s108
      %p110 = scmp.eq.s32.totalorder %s18, 0
      %p111 = por %p109, %p110
      %p112 = scmp.le.s32.totalorder 1, %s12
      %p113 = scmp.lt.s32.totalorder %s12, 5
      %p114 = pnand %p112, %p113
      %p115 = pneg %p114
      // Predicated region
      $region9: #{tpu_custom_call.1} parent=5 // pred_check
        _
      $region10: #{tpu_custom_call.1} parent=5 // pred_check_branch
        %117 = sbr.rel (%p114) target = $region12
      $region11: #{tpu_custom_call.1} parent=5 // pred_region
        %s118 = ssub.s32 %s12, 1
      $region12: #{tpu_custom_call.1} parent=5 // pred_fallthru
        _
      %p119 = scmp.lt.s32.totalorder %s12, 4
      // Predicated region
      $region13: #{tpu_custom_call.1} parent=5 // pred_check
        %p120 = pneg %p119
      $region14: #{tpu_custom_call.1} parent=5 // pred_check_branch
        %122 = sbr.rel (%p120) target = $region16
      $region15: #{tpu_custom_call.1} parent=5 // pred_region
        // Predicated region
        $region17: #{tpu_custom_call.1} parent=15 // pred_check
          %p123 = pneg %p46
        $region18: #{tpu_custom_call.1} parent=15 // pred_check_branch
          %125 = sbr.rel (%p123) target = $region20
        $region19: #{tpu_custom_call.1} parent=15 // pred_region
          %s126 = sand.u32 %s36, 1
          %s127 = scalar_lea.sflag [#allocation3], %s126
          %s128 = sand.u32 %s36, 1
          %s129 = smul.addr %s128, 4
          %s130 = scalar_lea.vmem [#allocation2], %s129
          %132 = vsyncadd %s127, 0
          %s133 = smul.addr %s19, 2
          %s134 = sadd.s32 %s20, %s133
          %s135 = smul.addr %s134, 4
          %s136 = scalar_lea.hbm %s0, %s135
          %s138 = sshll.u32 %s136, 4
          %s139 = int_to_ptr.hbm [resolvable:$true] %s138
          %s140 = sshll.u32 %s130, 4
          %s141 = int_to_ptr.vmem [resolvable:$true] %s140
          %143 = dma.hbm_to_vmem [thread:$0]  %s139, 64, %s141, %s127
        $region20: #{tpu_custom_call.1} parent=15 // pred_fallthru
          _
      $region16: #{tpu_custom_call.1} parent=5 // pred_fallthru
        _
      %p144 = scmp.le.s32.totalorder 1, %s12
      %p145 = scmp.lt.s32.totalorder %s12, 5
      %p146 = pnand %p144, %p145
      %p147 = pneg %p146
      // Predicated region
      $region21: #{tpu_custom_call.1} parent=5 // pred_check
        _
      $region22: #{tpu_custom_call.1} parent=5 // pred_check_branch
        %149 = sbr.rel (%p146) target = $region24
      $region23: #{tpu_custom_call.1} parent=5 // pred_region
        %s150 = ssub.s32 %s12, 1
        %s151 = sand.u32 %s39, 1
        %s152 = scalar_lea.sflag [#allocation3], %s151
        %s153 = sand.u32 %s39, 1
        %s154 = smul.addr %s153, 4
        %s155 = scalar_lea.vmem [#allocation2], %s154
        // Predicated region
        $region25: #{tpu_custom_call.1} parent=23 // pred_check
          %p156 = pneg %p52
        $region26: #{tpu_custom_call.1} parent=23 // pred_check_branch
          %158 = sbr.rel (%p156) target = $region28
        $region27: #{tpu_custom_call.1} parent=23 // pred_region
          %160 = dma.done %s152, 64
        $region28: #{tpu_custom_call.1} parent=23 // pred_fallthru
          _
        %s161 = sand.u32 %s39, 1
        %s162 = scalar_lea.sflag [#allocation3], %s161
        %s163 = sand.u32 %s39, 1
        %s164 = smul.addr %s163, 4
        %s165 = scalar_lea.vmem [#allocation2], %s164
        %p166 = pneg %p52
        %p167 = pneg %p49
        %p168 = pneg %p78
        %p169 = pneg %p75
        %p170 = scmp.lt.s32.totalorder %s21, 1
        %s171 = scalar_select %p170, %s21, 1
        %s172 = smul.addr %s171, 4
        %s173 = scalar_lea.vmem %s1, %s172
        %p174 = pneg %p104
        %p175 = pneg %p101
        %p176 = scmp.lt.s32.totalorder %s21, 1
        %s177 = scalar_select %p176, %s21, 1
        %s178 = smul.addr %s177, 4
        %s179 = scalar_lea.vmem %s2, %s178
        %p180 = scmp.lt.s32.totalorder %s21, 1
        %s181 = scalar_select %p180, %s21, 1
        %s182 = smul.addr %s181, 4
        %s183 = scalar_lea.vmem %s1, %s182
        %p184 = scmp.lt.s32.totalorder %s21, 1
        %s185 = scalar_select %p184, %s21, 1
        %s186 = smul.addr %s185, 4
        %s187 = scalar_lea.vmem %s2, %s186
        %p188 = scmp.eq.s32.totalorder %s22, 0
        // Predicated region
        $region29: #{tpu_custom_call.1} parent=23 // pred_check
          %p189 = pneg %p188
        $region30: #{tpu_custom_call.1} parent=23 // pred_check_branch
          %191 = sbr.rel (%p189) target = $region32
        $region31: #{tpu_custom_call.1} parent=23 // pred_region
          %vm192 = vcmask 3072
          %193 = vst.msk [vmem:[%s183] sm:$0xf] %vm192, 0.0
          %194 = vst.msk [vmem:[%s187] sm:$0xf] %vm192, 0.0
        $region32: #{tpu_custom_call.1} parent=23 // pred_fallthru
          _
        %v195 = vld [vmem:[%s155] sm:$0xf]
        %v196 = vld [vmem:[%s183] sm:$0xf]
        %vm197 = vcmask 1043456
        %v198 = vsel %vm197, %v195, 0.0
        %199 = vadd.xlane.f32.xlu0 %v198
        %v200 = vpop.xlane.xlu0 %199
        %v201 = vadd.f32 %v196, %v200
        %vm202 = vcmask 3072
        %203 = vst.msk [vmem:[%s183] sm:$0xf] %vm202, %v201
        %v204 = vld [vmem:[%s187] sm:$0xf]
        %v205 = vmul.f32 %v195, %v195
        %v206 = vsel %vm197, %v205, 0.0
        %207 = vadd.xlane.f32.xlu0 %v206
        %v208 = vpop.xlane.xlu0 %207
        %v209 = vadd.f32 %v204, %v208
        %210 = vst.msk [vmem:[%s187] sm:$0xf] %vm202, %v209
        %p211 = scmp.lt.s32.totalorder %s21, 1
        %s212 = scalar_select %p211, %s21, 1
        %s213 = smul.addr %s212, 4
        %s214 = scalar_lea.vmem %s1, %s213
        %p215 = scmp.lt.s32.totalorder %s21, 1
        %s216 = scalar_select %p215, %s21, 1
        %s217 = smul.addr %s216, 4
        %s218 = scalar_lea.vmem %s2, %s217
        // Predicated region
        $region33: #{tpu_custom_call.1} parent=23 // pred_check
          %p219 = pneg %p75
        $region34: #{tpu_custom_call.1} parent=23 // pred_check_branch
          %221 = sbr.rel (%p219) target = $region36
        $region35: #{tpu_custom_call.1} parent=23 // pred_region
          _
        $region36: #{tpu_custom_call.1} parent=23 // pred_fallthru
          _
        // Predicated region
        $region37: #{tpu_custom_call.1} parent=23 // pred_check
          %p222 = pneg %p101
        $region38: #{tpu_custom_call.1} parent=23 // pred_check_branch
          %224 = sbr.rel (%p222) target = $region40
        $region39: #{tpu_custom_call.1} parent=23 // pred_region
          _
        $region40: #{tpu_custom_call.1} parent=23 // pred_fallthru
          _
      $region24: #{tpu_custom_call.1} parent=5 // pred_fallthru
        _
      %p225 = scmp.le.s32.totalorder 2, %s12
      // Predicated region
      $region41: #{tpu_custom_call.1} parent=5 // pred_check
        %p226 = pneg %p225
      $region42: #{tpu_custom_call.1} parent=5 // pred_check_branch
        %228 = sbr.rel (%p226) target = $region44
      $region43: #{tpu_custom_call.1} parent=5 // pred_region
        %s229 = ssub.s32 %s12, 2
        // Predicated region
        $region45: #{tpu_custom_call.1} parent=43 // pred_check
          %p230 = pneg %p81
        $region46: #{tpu_custom_call.1} parent=43 // pred_check_branch
          %232 = sbr.rel (%p230) target = $region48
        $region47: #{tpu_custom_call.1} parent=43 // pred_region
          %p233 = scmp.lt.s32.totalorder %s23, 1
          %s234 = scalar_select %p233, %s23, 1
          %s235 = smul.addr %s234, 4
          %s236 = scalar_lea.vmem %s1, %s235
        $region48: #{tpu_custom_call.1} parent=43 // pred_fallthru
          _
        // Predicated region
        $region49: #{tpu_custom_call.1} parent=43 // pred_check
          %p237 = pneg %p107
        $region50: #{tpu_custom_call.1} parent=43 // pred_check_branch
          %239 = sbr.rel (%p237) target = $region52
        $region51: #{tpu_custom_call.1} parent=43 // pred_region
          %p240 = scmp.lt.s32.totalorder %s23, 1
          %s241 = scalar_select %p240, %s23, 1
          %s242 = smul.addr %s241, 4
          %s243 = scalar_lea.vmem %s2, %s242
        $region52: #{tpu_custom_call.1} parent=43 // pred_fallthru
          _
      $region44: #{tpu_custom_call.1} parent=5 // pred_fallthru
        _
    $region6: #{tpu_custom_call.1} parent=1 // loop_footer
      %s16 = sadd.s32 1, %s12
    $region7: #{tpu_custom_call.1} parent=1 // loop_footer_branch
      %11 = sbr.rel target = $region3
    $region8: #{tpu_custom_call.1} parent=1 // loop_exit
      _
    %244 = vsyncpa [#allocation3], 1
    %s245 = scalar_lea.sflag [#allocation3], 1
    %246 = vsyncpa %s245, 1

</llo_original>
